<compile_context>
chip_gen: v7x
topology: tpu7x:2x2x1
jax: 0.10.0
libtpu: 0.0.40
codegen_flags: <defaults>
</compile_context>

<pallas_src>
import math

import jax
import jax.numpy as jnp
from jax.experimental import pallas as pl
from jax.experimental.pallas import tpu as pltpu

_SMALL_BYTES = 256 << 10  # below this: single unblocked block, no grid


def _add_kernel(x_ref, y_ref, o_ref):
    # Elementwise add on one VMEM tile; dtype promotion happens here (free on
    # the VPU for this bandwidth-bound op).
    dt = o_ref.dtype
    o_ref[...] = x_ref[...].astype(dt) + y_ref[...].astype(dt)


def _add_scalar_kernel(x_ref, s_ref, o_ref):
    # x tile + broadcast scalar (s_ref is a (1,1) block).
    dt = o_ref.dtype
    o_ref[...] = x_ref[...].astype(dt) + s_ref[...].astype(dt)


def _sublane(itemsize: int) -> int:
    # Sublane tile: 8 for >=4B dtypes, 16 for 2B, 32 for 1B (packing).
    return max(8, 32 // max(1, itemsize))


def _lane_layout(total: int):
    """(rows, cols, pad): lane-dense factorization with cols a x128 multiple."""
    for cols in (1024, 512, 256, 128):
        if total % cols == 0:
            return total // cols, cols, 0
    cols = 1024
    padded = pl.cdiv(total, cols) * cols
    return padded // cols, cols, padded - total


def _vmem_budget() -> int:
    try:
        info = pltpu.get_tpu_info()
        phys = int(getattr(info, "vmem_capacity_bytes", 64 << 20))
    except Exception:
        phys = 64 << 20  # conservative (v7x per-TC)
    # 32 MiB scoped is safe on every generation (v7x default, raises v5e's 16).
    return min(32 << 20, phys // 2)


def add_pallas(x: jax.Array, y: jax.Array, *, donate_x: bool = False) -> jax.Array:
    """Equivalent of `torch.Tensor.__add__` (x + y) with the math in Pallas."""
    x = jnp.asarray(x)
    y = jnp.asarray(y)
    out_shape = jnp.broadcast_shapes(x.shape, y.shape)
    out_dtype = jnp.result_type(x.dtype, y.dtype)
    total = math.prod(out_shape) if out_shape else 1
    if total == 0:
        return jnp.zeros(out_shape, out_dtype)

    x_item = jnp.dtype(x.dtype).itemsize
    y_item = jnp.dtype(y.dtype).itemsize
    o_item = jnp.dtype(out_dtype).itemsize
    total_bytes = total * o_item

    # ---------------- tiny-input fast path: single unblocked block -----------
    if total_bytes <= _SMALL_BYTES:
        xb = jnp.broadcast_to(x, out_shape)
        yb = jnp.broadcast_to(y, out_shape)
        if len(out_shape) >= 2:
            r2 = (math.prod(out_shape[:-1]), out_shape[-1])
        else:
            r2 = (1, total)
        out2 = pl.pallas_call(
            _add_kernel,
            out_shape=jax.ShapeDtypeStruct(r2, out_dtype),
            cost_estimate=pl.CostEstimate(
                flops=total, transcendentals=0,
                bytes_accessed=total * (x_item + y_item + o_item)),
        )(xb.reshape(r2), yb.reshape(r2))
        return out2.reshape(out_shape)

    # ---------------- broadcast handling (avoid HBM materialization) ---------
    xs = math.prod(x.shape) if x.shape else 1
    ys = math.prod(y.shape) if y.shape else 1
    scalar = None
    if x.shape == out_shape and y.shape == out_shape:
        dense_x, dense_y = x, y
    elif x.shape == out_shape and ys == 1:
        dense_x, dense_y, scalar = x, None, y.reshape(1, 1)
    elif y.shape == out_shape and xs == 1:
        dense_x, dense_y, scalar = y, None, x.reshape(1, 1)  # add commutes
    else:
        # TODO(synk): general N-D broadcasts are materialized in the wrapper;
        # push them into the BlockSpec index_map if this case becomes hot.
        dense_x = jnp.broadcast_to(x, out_shape)
        dense_y = jnp.broadcast_to(y, out_shape)

    # ---------------- lane-dense flattened layout -----------------------------
    rows, cols, pad = _lane_layout(total)

    def _flat(a):
        af = a.reshape(-1)
        if pad:
            af = jnp.pad(af, (0, pad))
        return af.reshape(rows, cols)

    x2d = _flat(dense_x)
    y2d = _flat(dense_y) if dense_y is not None else None

    # ---------------- block sizing --------------------------------------------
    sub = _sublane(min(x_item, y_item, o_item))
    vmem_budget = _vmem_budget()
    bytes_per_row = cols * (x_item + o_item + (y_item if y2d is not None else 0))
    tm = min(
        rows,
        # keep double-buffered (x, y, out) under ~75% of the scoped budget
        max(sub, ((vmem_budget * 3 // 4) // (2 * bytes_per_row)) // sub * sub),
        # and cap the output block at ~4 MiB (roofline-saturating everywhere)
        max(sub, ((4 << 20) // (cols * o_item)) // sub * sub),
    )
    # Guarantee enough grid steps for pipelining and v7x dual-TC sharding.
    min_steps = 8 if total_bytes > (8 << 20) else (2 if total_bytes > _SMALL_BYTES else 1)
    if min_steps > 1 and rows >= min_steps * sub:
        tm = min(tm, max(sub, (rows // min_steps) // sub * sub))
    tm = max(sub, min(tm, rows))

    grid = (pl.cdiv(rows, tm),)

    cost = pl.CostEstimate(
        flops=total,
        transcendentals=0,
        bytes_accessed=total * (x_item + o_item)
        + (total * y_item if y2d is not None else y_item),
    )
    extra = {}
    if (donate_x and y2d is not None and pad == 0
            and dense_x is x and x.dtype == out_dtype):
        extra["input_output_aliases"] = {0: 0}

    common = dict(
        out_shape=jax.ShapeDtypeStruct((rows, cols), out_dtype),
        compiler_params=pltpu.CompilerParams(
            dimension_semantics=("parallel",),  # pure elementwise -> megacore split
            vmem_limit_bytes=vmem_budget,
        ),
        cost_estimate=cost,
        **extra,
    )

    if y2d is not None:
        out2d = pl.pallas_call(
            _add_kernel,
            grid_spec=pl.GridSpec(
                grid=grid,
                in_specs=[
                    pl.BlockSpec((tm, cols), lambda i: (i, 0)),
                    pl.BlockSpec((tm, cols), lambda i: (i, 0)),
                ],
                out_specs=pl.BlockSpec((tm, cols), lambda i: (i, 0)),
            ),
            **common,
        )(x2d, y2d)
    else:
        out2d = pl.pallas_call(
            _add_scalar_kernel,
            grid_spec=pl.GridSpec(
                grid=grid,
                in_specs=[
                    pl.BlockSpec((tm, cols), lambda i: (i, 0)),
                    pl.BlockSpec((1, 1), lambda i: (0, 0)),
                ],
                out_specs=pl.BlockSpec((tm, cols), lambda i: (i, 0)),
            ),
            **common,
        )(x2d, scalar)

    out_flat = out2d.reshape(-1)
    if pad:
        out_flat = out_flat[:total]
    return out_flat.reshape(out_shape)


if __name__ == "__main__":
    key = jax.random.PRNGKey(0)
    k1, k2, k3, k4, k5, k6, k7 = jax.random.split(key, 7)

    # 1) Small NCHW-like residual add (fast path, consistent with typical usage).
    x = jax.random.normal(k1, (2, 4, 16, 16), dtype=jnp.float32)
    y = jax.random.normal(k2, (2, 4, 16, 16), dtype=jnp.float32)
    out = add_pallas(x, y)
    jax.block_until_ready(out)
    ref = x + y
    assert out.shape == ref.shape and out.dtype == ref.dtype
    assert bool(jnp.allclose(out, ref)), "small same-shape add mismatch"

    # 2) Larger same-shape add (tiled main path, lane-dense, multi-step grid).
    xa = jax.random.normal(k3, (8, 32, 64, 64), dtype=jnp.float32)
    ya = jax.random.normal(k4, (8, 32, 64, 64), dtype=jnp.float32)
    outa = add_pallas(xa, ya)
    jax.block_until_ready(outa)
    assert bool(jnp.allclose(outa, xa + ya)), "tiled add mismatch"

    # 3) Odd total size + scalar broadcast (padded layout + in-kernel broadcast).
    xb = jax.random.normal(k5, (7, 97, 129), dtype=jnp.float32)
    yb = jnp.float32(1.5)
    outb = add_pallas(xb, yb)
    jax.block_until_ready(outb)
    assert bool(jnp.allclose(outb, xb + yb)), "padded scalar-broadcast add mismatch"

    # 4) Mixed-dtype general broadcast (wrapper broadcast, in-kernel promotion).
    xc = jax.random.normal(k6, (32, 128, 64), dtype=jnp.float32)
    yc = jax.random.normal(k7, (64,), dtype=jnp.bfloat16)
    outc = add_pallas(xc, yc)
    jax.block_until_ready(outc)
    refc = xc + yc
    assert outc.dtype == refc.dtype
    assert bool(jnp.allclose(outc, refc, rtol=1e-3, atol=1e-3)), "broadcast add mismatch"

    print("KERNEL_OK")
</pallas_src>

<mosaic_0001>
module attributes {stable_mosaic.version = 11 : i64} {
  func.func @_add_kernel(%arg0: memref<128x16xf32, #tpu.memory_space<vmem>>, %arg1: memref<128x16xf32, #tpu.memory_space<vmem>>, %arg2: memref<128x16xf32, #tpu.memory_space<vmem>>) attributes {dimension_semantics = [], scalar_prefetch = 0 : i64, scratch_operands = 0 : i64, tpu.core_type = #tpu.core_type<tc>} {
    %c0 = arith.constant 0 : index
    %c0_0 = arith.constant 0 : index
    %0 = vector.load %arg0[%c0, %c0_0] : memref<128x16xf32, #tpu.memory_space<vmem>>, vector<128x16xf32>
    %c0_1 = arith.constant 0 : index
    %c0_2 = arith.constant 0 : index
    %1 = vector.load %arg1[%c0_1, %c0_2] : memref<128x16xf32, #tpu.memory_space<vmem>>, vector<128x16xf32>
    %2 = arith.addf %0, %1 : vector<128x16xf32>
    %c0_3 = arith.constant 0 : index
    %c0_4 = arith.constant 0 : index
    %3 = vector.load %arg2[%c0_3, %c0_4] : memref<128x16xf32, #tpu.memory_space<vmem>>, vector<128x16xf32>
    tpu.vector_store %arg2[%c0_3, %c0_4], %2 {strides = array<i32>} : memref<128x16xf32, #tpu.memory_space<vmem>>, vector<128x16xf32>,
    return
  }
}

</mosaic_0001>

<llo_original>
// kernel: tpu_custom_call.1
$region0: #{tpu_custom_call.1}
  #allocation0 [shape = 'u32[]', space=smem, size = 0x4, offset = 0x4, fixed_abs, tag = 'smem constant byte address 0x4 - core index']
  #allocation1 [shape = 'u32[144,128]{1,0:T(1,128)}', space=vmem, size = 0x12000, scoped, tag = 'internal scratch']
  %s0 = inlined_call_operand.vmem [shape: f32[128,16], index: 0, kind: input, shape index: {}]
  %s1 = inlined_call_operand.vmem [shape: f32[128,16], index: 1, kind: input, shape index: {}]
  %s2 = inlined_call_operand.vmem [shape: f32[128,16], index: 2, kind: output, shape index: {}]
  %s3 = sld [smem:[#allocation0]]
  $region18: #{tpu_custom_call.1} parent=0
    _
  %s5 = ssub.s32 1, %s3
  %s6 = scalar_select 0, %s5, %s3
  // Predicated region
  $region2: #{tpu_custom_call.1} parent=0 // pred_check
    _
  $region3: #{tpu_custom_call.1} parent=0 // pred_check_branch
    %8 = sbr.rel (0) target = $region5
  $region4: #{tpu_custom_call.1} parent=0 // pred_region
    _
  $region5: #{tpu_custom_call.1} parent=0 // pred_fallthru
    _
  // Predicated region
  $region6: #{tpu_custom_call.1} parent=0 // pred_check
    _
  $region7: #{tpu_custom_call.1} parent=0 // pred_check_branch
    %10 = sbr.rel (0) target = $region9
  $region8: #{tpu_custom_call.1} parent=0 // pred_region
    _
  $region9: #{tpu_custom_call.1} parent=0 // pred_fallthru
    _
  %v11 = vld [vmem:[%s0] sm:$0xff]
  %v12 = vld [vmem:[%s0 + $0x8] sm:$0xff]
  %v13 = vld [vmem:[%s0 + $0x10] sm:$0xff]
  %v14 = vld [vmem:[%s0 + $0x18] sm:$0xff]
  %v15 = vld [vmem:[%s0 + $0x20] sm:$0xff]
  %v16 = vld [vmem:[%s0 + $0x28] sm:$0xff]
  %v17 = vld [vmem:[%s0 + $0x30] sm:$0xff]
  %v18 = vld [vmem:[%s0 + $0x38] sm:$0xff]
  %v19 = vld [vmem:[%s0 + $0x40] sm:$0xff]
  %v20 = vld [vmem:[%s0 + $0x48] sm:$0xff]
  %v21 = vld [vmem:[%s0 + $0x50] sm:$0xff]
  %v22 = vld [vmem:[%s0 + $0x58] sm:$0xff]
  %v23 = vld [vmem:[%s0 + $0x60] sm:$0xff]
  %v24 = vld [vmem:[%s0 + $0x68] sm:$0xff]
  %v25 = vld [vmem:[%s0 + $0x70] sm:$0xff]
  %v26 = vld [vmem:[%s0 + $0x78] sm:$0xff]
  %v27 = vld [vmem:[%s1] sm:$0xff]
  %v28 = vld [vmem:[%s1 + $0x8] sm:$0xff]
  %v29 = vld [vmem:[%s1 + $0x10] sm:$0xff]
  %v30 = vld [vmem:[%s1 + $0x18] sm:$0xff]
  %v31 = vld [vmem:[%s1 + $0x20] sm:$0xff]
  %v32 = vld [vmem:[%s1 + $0x28] sm:$0xff]
  %v33 = vld [vmem:[%s1 + $0x30] sm:$0xff]
  %v34 = vld [vmem:[%s1 + $0x38] sm:$0xff]
  %v35 = vld [vmem:[%s1 + $0x40] sm:$0xff]
  %v36 = vld [vmem:[%s1 + $0x48] sm:$0xff]
  %v37 = vld [vmem:[%s1 + $0x50] sm:$0xff]
  %v38 = vld [vmem:[%s1 + $0x58] sm:$0xff]
  %v39 = vld [vmem:[%s1 + $0x60] sm:$0xff]
  %v40 = vld [vmem:[%s1 + $0x68] sm:$0xff]
  %v41 = vld [vmem:[%s1 + $0x70] sm:$0xff]
  %v42 = vld [vmem:[%s1 + $0x78] sm:$0xff]
  %v43 = vadd.f32 %v11, %v27
  %v44 = vadd.f32 %v12, %v28
  %v45 = vadd.f32 %v13, %v29
  %v46 = vadd.f32 %v14, %v30
  %v47 = vadd.f32 %v15, %v31
  %v48 = vadd.f32 %v16, %v32
  %v49 = vadd.f32 %v17, %v33
  %v50 = vadd.f32 %v18, %v34
  %v51 = vadd.f32 %v19, %v35
  %v52 = vadd.f32 %v20, %v36
  %v53 = vadd.f32 %v21, %v37
  %v54 = vadd.f32 %v22, %v38
  %v55 = vadd.f32 %v23, %v39
  %v56 = vadd.f32 %v24, %v40
  %v57 = vadd.f32 %v25, %v41
  %v58 = vadd.f32 %v26, %v42
  %vm59 = vcmask 130048
  %60 = vst.msk [vmem:[%s2] sm:$0xff] %vm59, %v43
  %61 = vst.msk [vmem:[%s2 + $0x8] sm:$0xff] %vm59, %v44
  %62 = vst.msk [vmem:[%s2 + $0x10] sm:$0xff] %vm59, %v45
  %63 = vst.msk [vmem:[%s2 + $0x18] sm:$0xff] %vm59, %v46
  %64 = vst.msk [vmem:[%s2 + $0x20] sm:$0xff] %vm59, %v47
  %65 = vst.msk [vmem:[%s2 + $0x28] sm:$0xff] %vm59, %v48
  %66 = vst.msk [vmem:[%s2 + $0x30] sm:$0xff] %vm59, %v49
  %67 = vst.msk [vmem:[%s2 + $0x38] sm:$0xff] %vm59, %v50
  %68 = vst.msk [vmem:[%s2 + $0x40] sm:$0xff] %vm59, %v51
  %69 = vst.msk [vmem:[%s2 + $0x48] sm:$0xff] %vm59, %v52
  %70 = vst.msk [vmem:[%s2 + $0x50] sm:$0xff] %vm59, %v53
  %71 = vst.msk [vmem:[%s2 + $0x58] sm:$0xff] %vm59, %v54
  %72 = vst.msk [vmem:[%s2 + $0x60] sm:$0xff] %vm59, %v55
  %73 = vst.msk [vmem:[%s2 + $0x68] sm:$0xff] %vm59, %v56
  %74 = vst.msk [vmem:[%s2 + $0x70] sm:$0xff] %vm59, %v57
  %75 = vst.msk [vmem:[%s2 + $0x78] sm:$0xff] %vm59, %v58
  // Predicated region
  $region10: #{tpu_custom_call.1} parent=0 // pred_check
    _
  $region11: #{tpu_custom_call.1} parent=0 // pred_check_branch
    %77 = sbr.rel (0) target = $region13
  $region12: #{tpu_custom_call.1} parent=0 // pred_region
    _
  $region13: #{tpu_custom_call.1} parent=0 // pred_fallthru
    _
  // Predicated region
  $region14: #{tpu_custom_call.1} parent=0 // pred_check
    _
  $region15: #{tpu_custom_call.1} parent=0 // pred_check_branch
    %79 = sbr.rel (0) target = $region17
  $region16: #{tpu_custom_call.1} parent=0 // pred_region
    _
  $region17: #{tpu_custom_call.1} parent=0 // pred_fallthru
    _

</llo_original>
